<compile_context>
chip_gen: v6e
topology: v6e:2x2x1
jax: 0.10.0
libtpu: 0.0.40
codegen_flags: <defaults>
</compile_context>

<pallas_src>
import jax
import jax.numpy as jnp
from jax import lax
from jax.experimental import pallas as pl
from jax.experimental.pallas import tpu as pltpu


def _round_up(n, m):
    return ((n + m - 1) // m) * m


def _disc_kernel(cat_ref, w1_ref, b1_ref, w3_ref, b3_ref, o_ref):
    # fc1: bf16 MXU matmul, f32 accumulation; bias add + tanh in f32.
    h = jnp.dot(cat_ref[...], w1_ref[...], preferred_element_type=jnp.float32)
    h = jnp.tanh(h + b1_ref[...])                        # (TB, Hp) f32

    # fc3: contract the hidden axis: (1, Hp) x (TB, Hp)^T -> (1, TB).
    # MXU output width is TB (not 1) and the logit row is already lane-dense
    # (batch on the lane axis), so the store is a full unmasked vst.
    logit = lax.dot_general(
        w3_ref[...], h.astype(jnp.bfloat16),
        dimension_numbers=(((1,), (1,)), ((), ())),
        preferred_element_type=jnp.float32,
    )                                                    # (1, TB) f32
    o_ref[...] = jax.nn.sigmoid(logit + b3_ref[0, 0]).astype(o_ref.dtype)


def discriminator_forward(x, a, params, *, block_b=512):
    """x: (B, S) f32, a: (B, A) f32 -> (B, 1) f32 probabilities."""
    w1, b1, w3, b3 = params      # (Din,Hp) bf16, (1,Hp) f32, (1,Hp) bf16, (1,1) f32
    B = x.shape[0]
    Din = x.shape[1] + a.shape[1]
    Hp = w1.shape[1]

    if B <= block_b:
        tb = max(8, _round_up(B, 8))       # single batch tile
    else:
        tb = block_b                       # multi-tile: lane-dense output needs %128
        assert tb % 128 == 0
    bp = _round_up(B, tb)
    num_tiles = bp // tb

    # Concat once outside the kernel, pad the batch to the tile grid, stream bf16.
    cat = jnp.concatenate([x, a], axis=1)
    if bp != B:
        cat = jnp.pad(cat, ((0, bp - B), (0, 0)))
    cat = cat.astype(jnp.bfloat16)

    out = pl.pallas_call(
        _disc_kernel,
        grid=(num_tiles,),
        in_specs=[
            pl.BlockSpec((tb, Din), lambda i: (i, 0)),          # batch tile of input
            pl.BlockSpec((Din, Hp), lambda i: (0, 0)),          # resident fc1 weight
            pl.BlockSpec((1, Hp), lambda i: (0, 0)),            # resident fc1 bias row
            pl.BlockSpec((1, Hp), lambda i: (0, 0)),            # resident fc3 weight row
            pl.BlockSpec(memory_space=pltpu.MemorySpace.SMEM),  # scalar fc3 bias
        ],
        out_specs=pl.BlockSpec((1, tb), lambda i: (0, i)),      # lane-dense logits
        out_shape=jax.ShapeDtypeStruct((1, bp), jnp.float32),
        compiler_params=pltpu.CompilerParams(
            dimension_semantics=("parallel",),
        ),
    )(cat, w1, b1, w3, b3)
    return out[0, :B][:, None]


def init_params(key, state_dim, hidden_dim, action_dim):
    """Shapes match the PyTorch module; fc1/fc3 weights ~ N(0, 0.1).

    Weights are stored pre-transposed ((in, out)) and the hidden dim is
    zero-padded to a multiple of 128 -- numerically exact (tanh(0)=0 and the
    padded w3 entries are zero). Matmul operands are kept in bf16 to halve HBM
    traffic; biases stay f32.
    """
    k1, k2, k3, k4 = jax.random.split(key, 4)
    din = state_dim + action_dim
    hp = _round_up(hidden_dim, 128)
    w1 = 0.1 * jax.random.normal(k1, (din, hidden_dim), dtype=jnp.float32)
    b1 = 0.01 * jax.random.normal(k2, (hidden_dim,), dtype=jnp.float32)
    w3 = 0.1 * jax.random.normal(k3, (hidden_dim,), dtype=jnp.float32)
    b3 = 0.01 * jax.random.normal(k4, (1, 1), dtype=jnp.float32)
    w1p = jnp.zeros((din, hp), jnp.float32).at[:, :hidden_dim].set(w1).astype(jnp.bfloat16)
    b1p = jnp.zeros((1, hp), jnp.float32).at[0, :hidden_dim].set(b1)
    w3p = jnp.zeros((1, hp), jnp.float32).at[0, :hidden_dim].set(w3).astype(jnp.bfloat16)
    return (w1p, b1p, w3p, b3)


def reference_forward(x, a, params):
    """Pure-JAX reference using the same bf16-quantized operands, f32 math."""
    w1, b1, w3, b3 = params
    cat = jnp.concatenate([x, a], axis=1).astype(jnp.bfloat16).astype(jnp.float32)
    h = jnp.tanh(jnp.dot(cat, w1.astype(jnp.float32),
                         preferred_element_type=jnp.float32) + b1)
    logit = jnp.sum(h * w3.astype(jnp.float32), axis=1) + b3[0, 0]
    return jax.nn.sigmoid(logit)[:, None]


if __name__ == "__main__":
    batch, state_dim, action_dim, hidden_dim = 2, 8, 4, 32

    key = jax.random.PRNGKey(0)
    kx, ka, kp, kx2, ka2 = jax.random.split(key, 5)
    x = jax.random.normal(kx, (batch, state_dim), dtype=jnp.float32)
    a = jax.random.normal(ka, (batch, action_dim), dtype=jnp.float32)
    params = init_params(kp, state_dim, hidden_dim, action_dim)

    out = jax.block_until_ready(discriminator_forward(x, a, params))
    ref = reference_forward(x, a, params)
    assert out.shape == (batch, 1)
    assert jnp.allclose(out, ref, atol=2e-3, rtol=2e-3)

    # multi-tile path: batch not divisible by the 512-row tile (exercises padding,
    # the pipelined grid, and the lane-dense multi-block output writeback).
    B2 = 700
    x2 = jax.random.normal(kx2, (B2, state_dim), dtype=jnp.float32)
    a2 = jax.random.normal(ka2, (B2, action_dim), dtype=jnp.float32)
    out2 = jax.block_until_ready(discriminator_forward(x2, a2, params))
    ref2 = reference_forward(x2, a2, params)
    assert out2.shape == (B2, 1)
    assert jnp.allclose(out2, ref2, atol=2e-3, rtol=2e-3)

    print("KERNEL_OK")
</pallas_src>

<mosaic_0001>
module attributes {stable_mosaic.version = 11 : i64} {
  func.func @_disc_kernel(%arg0: i32, %arg1: memref<8x12xbf16, #tpu.memory_space<vmem>>, %arg2: memref<12x128xbf16, #tpu.memory_space<vmem>>, %arg3: memref<1x128xf32, #tpu.memory_space<vmem>>, %arg4: memref<1x128xbf16, #tpu.memory_space<vmem>>, %arg5: memref<1x1xf32, #tpu.memory_space<smem>>, %arg6: memref<1x8xf32, #tpu.memory_space<vmem>>) attributes {dimension_semantics = [#tpu.dimension_semantics<parallel>], iteration_bounds = array<i64: 1>, scalar_prefetch = 0 : i64, scratch_operands = 0 : i64, tpu.core_type = #tpu.core_type<tc>, window_params = [{transform_indices = @transform_0, window_bounds = array<i64: 8, 12>}, {pipeline_mode = #tpu.pipeline_mode<synchronous>, transform_indices = @transform_1, window_bounds = array<i64: 12, 128>}, {pipeline_mode = #tpu.pipeline_mode<synchronous>, transform_indices = @transform_2, window_bounds = array<i64: 1, 128>}, {pipeline_mode = #tpu.pipeline_mode<synchronous>, transform_indices = @transform_3, window_bounds = array<i64: 1, 128>}, {transform_indices = @transform_4, window_bounds = array<i64: 1, 1>}, {transform_indices = @transform_5, window_bounds = array<i64: 1, 8>}]} {
    %c0 = arith.constant 0 : index
    %c0_0 = arith.constant 0 : index
    %0 = vector.load %arg1[%c0, %c0_0] : memref<8x12xbf16, #tpu.memory_space<vmem>>, vector<8x12xbf16>
    %c0_1 = arith.constant 0 : index
    %c0_2 = arith.constant 0 : index
    %1 = vector.load %arg2[%c0_1, %c0_2] : memref<12x128xbf16, #tpu.memory_space<vmem>>, vector<12x128xbf16>
    %cst = arith.constant dense<0.000000e+00> : vector<8x128xf32>
    %2 = tpu.matmul %0, %1, %cst {dimension_numbers = #tpu.dot_dimension_numbers<[1], [0], [0], [1], [0, 0, 1, 1], [], []>} : vector<8x12xbf16>, vector<12x128xbf16>, vector<8x128xf32> -> vector<8x128xf32>
    %c0_3 = arith.constant 0 : index
    %c0_4 = arith.constant 0 : index
    %3 = vector.load %arg3[%c0_3, %c0_4] : memref<1x128xf32, #tpu.memory_space<vmem>>, vector<1x128xf32>
    %4 = vector.broadcast %3 : vector<1x128xf32> to vector<8x128xf32>
    %5 = arith.addf %2, %4 : vector<8x128xf32>
    %6 = math.tanh %5 : vector<8x128xf32>
    %c0_5 = arith.constant 0 : index
    %c0_6 = arith.constant 0 : index
    %7 = vector.load %arg4[%c0_5, %c0_6] : memref<1x128xbf16, #tpu.memory_space<vmem>>, vector<1x128xbf16>
    %8 = arith.truncf %6 : vector<8x128xf32> to vector<8x128xbf16>
    %cst_7 = arith.constant dense<0.000000e+00> : vector<1x8xf32>
    %9 = tpu.matmul %7, %8, %cst_7 {dimension_numbers = #tpu.dot_dimension_numbers<[1], [1], [0], [0], [0, 0, 1, 0], [], []>} : vector<1x128xbf16>, vector<8x128xbf16>, vector<1x8xf32> -> vector<1x8xf32>
    %c0_8 = arith.constant 0 : index
    %c0_9 = arith.constant 0 : index
    %10 = memref.load %arg5[%c0_8, %c0_9] : memref<1x1xf32, #tpu.memory_space<smem>>
    %11 = vector.broadcast %10 : f32 to vector<1x8xf32>
    %12 = arith.addf %9, %11 : vector<1x8xf32>
    %13 = arith.negf %12 : vector<1x8xf32>
    %14 = math.exp %13 : vector<1x8xf32>
    %cst_10 = arith.constant 1.000000e+00 : f32
    %15 = vector.broadcast %cst_10 : f32 to vector<1x8xf32>
    %16 = arith.addf %15, %14 : vector<1x8xf32>
    %17 = arith.divf %15, %16 : vector<1x8xf32>
    %c0_11 = arith.constant 0 : index
    %c0_12 = arith.constant 0 : index
    %18 = vector.load %arg6[%c0_11, %c0_12] : memref<1x8xf32, #tpu.memory_space<vmem>>, vector<1x8xf32>
    tpu.vector_store %arg6[%c0_11, %c0_12], %17 {strides = array<i32>} : memref<1x8xf32, #tpu.memory_space<vmem>>, vector<1x8xf32>,
    return
  }
  func.func @transform_0(%arg0: i32) -> (i32, i32) {
    %c0_i32 = arith.constant 0 : i32
    %c0_i32_0 = arith.constant 0 : i32
    return %arg0, %c0_i32 : i32, i32
  }
  func.func @transform_1(%arg0: i32) -> (i32, i32) {
    %c0_i32 = arith.constant 0 : i32
    %c0_i32_0 = arith.constant 0 : i32
    %c0_i32_1 = arith.constant 0 : i32
    return %c0_i32, %c0_i32_0 : i32, i32
  }
  func.func @transform_2(%arg0: i32) -> (i32, i32) {
    %c0_i32 = arith.constant 0 : i32
    %c0_i32_0 = arith.constant 0 : i32
    %c0_i32_1 = arith.constant 0 : i32
    return %c0_i32, %c0_i32_0 : i32, i32
  }
  func.func @transform_3(%arg0: i32) -> (i32, i32) {
    %c0_i32 = arith.constant 0 : i32
    %c0_i32_0 = arith.constant 0 : i32
    %c0_i32_1 = arith.constant 0 : i32
    return %c0_i32, %c0_i32_0 : i32, i32
  }
  func.func @transform_4(%arg0: i32) -> (i32, i32) {
    %c0_i32 = arith.constant 0 : i32
    %c0_i32_0 = arith.constant 0 : i32
    %c0_i32_1 = arith.constant 0 : i32
    return %c0_i32, %c0_i32_0 : i32, i32
  }
  func.func @transform_5(%arg0: i32) -> (i32, i32) {
    %c0_i32 = arith.constant 0 : i32
    %c0_i32_0 = arith.constant 0 : i32
    return %c0_i32, %arg0 : i32, i32
  }
}

</mosaic_0001>

<llo_original>
// kernel: tpu_custom_call.1
$region0: #{tpu_custom_call.1}
  #allocation0 [shape = 'u32[]', space=smem, size = 0x4, offset = 0x4, fixed_abs, tag = 'smem constant byte address 0x4 - core index']
  #allocation1 [shape = 'u32[144,128]{1,0:T(1,128)}', space=vmem, size = 0x12000, scoped, tag = 'internal scratch']
  #allocation2 [shape = 'f32[1,1]{1,0:T(1,128)S(6)}', space=smem, size = 0x200, scoped, tag = 'scoped memory for tpu_custom_call.1']
  %s0 = inlined_call_operand.hbm [shape: bf16[8,12], index: 0, kind: input, shape index: {}]
  %s1 = inlined_call_operand.hbm [shape: bf16[12,128], index: 1, kind: input, shape index: {}]
  %s2 = inlined_call_operand.vmem [shape: f32[1,128], index: 2, kind: input, shape index: {}]
  %s3 = inlined_call_operand.vmem [shape: bf16[1,128], index: 3, kind: input, shape index: {}]
  %s4 = inlined_call_operand.<no memory space> [shape: f32[1,1], index: 4, kind: input, shape index: {}]
  %s5 = inlined_call_operand.hbm [shape: f32[1,8], index: 5, kind: output, shape index: {}]
  %s6 = sld [smem:[#allocation0]]
  $region38: #{tpu_custom_call.1} parent=0
    _
  %s8 = ssub.s32 1, %s6
  %s9 = scalar_select 0, %s8, %s6
  %10 = sst [smem:[#allocation2]] %s4
  $region1: #{tpu_custom_call.1} parent=0
    #allocation3 [shape = 'u8[2048]{0}', space=vmem, size = 0x800, scoped, tag = 'input window, operand 0, single buffered']
    #allocation4 [shape = 's32[1]{0}', space=sflag, size = 0x4, scoped, tag = 'scoped memory for tpu_custom_call.1']
    #allocation5 [shape = 's32[1]{0}', space=sflag, size = 0x4, scoped, tag = 'scoped memory for tpu_custom_call.1']
    #allocation6 [shape = 'u8[4096]{0}', space=vmem, size = 0x1000, scoped, tag = 'input window, operand 1, single buffered']
    #allocation7 [shape = 's32[1]{0}', space=sflag, size = 0x4, scoped, tag = 'scoped memory for tpu_custom_call.1']
    #allocation8 [shape = 'u8[512]{0}', space=vmem, size = 0x400, scoped, tag = 'output window, operand 0, single buffered']
    %11 = vsyncpa [#allocation4], 0
    %12 = vsyncpa [#allocation7], 0
    %13 = vsyncpa [#allocation5], 0
    // Predicated region
    $region2: #{tpu_custom_call.1} parent=1 // pred_check
      _
    $region3: #{tpu_custom_call.1} parent=1 // pred_check_branch
      %15 = sbr.rel (0) target = $region5
    $region4: #{tpu_custom_call.1} parent=1 // pred_region
      %s17 = ssub.s32 64, 64
      %18 = vsyncadd [#allocation4], %s17
      %s20 = sshll.u32 [#allocation3], 4
      %s21 = int_to_ptr.vmem [resolvable:$true] %s20
      %23 = dma.hbm_to_vmem [thread:$0]  %s0, 64, %s21, [#allocation4]
    $region5: #{tpu_custom_call.1} parent=1 // pred_fallthru
      _
    // Predicated region
    $region6: #{tpu_custom_call.1} parent=1 // pred_check
      _
    $region7: #{tpu_custom_call.1} parent=1 // pred_check_branch
      %25 = sbr.rel (0) target = $region9
    $region8: #{tpu_custom_call.1} parent=1 // pred_region
      %s27 = ssub.s32 128, 128
      %28 = vsyncadd [#allocation7], %s27
      %s29 = sshll.u32 [#allocation6], 4
      %s30 = int_to_ptr.vmem [resolvable:$true] %s29
      %35 = dma.hbm_to_vmem [thread:$0]  %s1, 128, %s30, [#allocation7], 64, 64, 4
    $region9: #{tpu_custom_call.1} parent=1 // pred_fallthru
      _
    // Predicated region
    $region10: #{tpu_custom_call.1} parent=1 // pred_check
      _
    $region11: #{tpu_custom_call.1} parent=1 // pred_check_branch
      %37 = sbr.rel (0) target = $region13
    $region12: #{tpu_custom_call.1} parent=1 // pred_region
      _
    $region13: #{tpu_custom_call.1} parent=1 // pred_fallthru
      _
    // Predicated region
    $region14: #{tpu_custom_call.1} parent=1 // pred_check
      _
    $region15: #{tpu_custom_call.1} parent=1 // pred_check_branch
      %39 = sbr.rel (0) target = $region17
    $region16: #{tpu_custom_call.1} parent=1 // pred_region
      _
    $region17: #{tpu_custom_call.1} parent=1 // pred_fallthru
      _
    // Predicated region
    $region18: #{tpu_custom_call.1} parent=1 // pred_check
      _
    $region19: #{tpu_custom_call.1} parent=1 // pred_check_branch
      %41 = sbr.rel (0) target = $region21
    $region20: #{tpu_custom_call.1} parent=1 // pred_region
      _
    $region21: #{tpu_custom_call.1} parent=1 // pred_fallthru
      _
    // Predicated region
    $region22: #{tpu_custom_call.1} parent=1 // pred_check
      _
    $region23: #{tpu_custom_call.1} parent=1 // pred_check_branch
      %43 = sbr.rel (0) target = $region25
    $region24: #{tpu_custom_call.1} parent=1 // pred_region
      %44 = dma.done [#allocation4], 64
    $region25: #{tpu_custom_call.1} parent=1 // pred_fallthru
      _
    // Predicated region
    $region26: #{tpu_custom_call.1} parent=1 // pred_check
      _
    $region27: #{tpu_custom_call.1} parent=1 // pred_check_branch
      %46 = sbr.rel (0) target = $region29
    $region28: #{tpu_custom_call.1} parent=1 // pred_region
      %47 = dma.done [#allocation7], 128
    $region29: #{tpu_custom_call.1} parent=1 // pred_fallthru
      _
    %v49 = vld [vmem:[#allocation3] sm:$0xf]
    %v50 = vld [vmem:[#allocation6] sm:$0xf]
    %v51 = vld [vmem:[#allocation6 + $0x4] sm:$0x3]
    %v52 = vld [vmem:[%s2] sm:$0x1]
    %v54 = vlaneseq
    %v55 = vshrl.u32 %v54, 7
    %v56 = vsub.s32 0, %v55
    %v57 = vrot.slane %v52, %v56
    %v61 = vunpack.c.l.b16 %v50
    %v62 = vunpack.c.l.b16 %v51
    %v63 = vpack.c.b16 %v62, %v61
    %vm64 = vcmask 97280
    %v66 = vsel %vm64, %v49, 0
    %vm68 = vcmask 1045504
    %v70 = vsel %vm68, %v63, 0
    %72 = vmatprep.subr.bf16.mxu0 0
    %73 = vmatpush1.bf16.msra.mxu0 0
    %74 = vmatprep.subr.bf16.mxu0 0
    %75 = vmatpush1.bf16.msra.mxu0 0
    %76 = vmatprep.subr.bf16.mxu0 0
    %77 = vmatpush1.bf16.msra.mxu0 0
    %78 = vmatprep.subr.bf16.mxu0 0
    %79 = vmatpush1.bf16.msra.mxu0 0
    %80 = vmatprep.subr.bf16.mxu0 0
    %81 = vmatpush1.bf16.msra.mxu0 0
    %82 = vmatprep.subr.bf16.mxu0 0
    %83 = vmatpush1.bf16.msra.mxu0 0
    %84 = vmatprep.subr.bf16.mxu0 0
    %85 = vmatpush1.bf16.msra.mxu0 0
    %86 = vmatprep.subr.bf16.mxu0 0
    %87 = vmatpush1.bf16.msra.mxu0 %v70
    %88 = vmatprep.subr.bf16.mxu0 0
    %89 = vmatpush2.bf16.msra.mxu0 0
    %90 = vmatprep.subr.bf16.mxu0 0
    %91 = vmatpush2.bf16.msra.mxu0 0
    %92 = vmatprep.subr.bf16.mxu0 0
    %93 = vmatpush2.bf16.msra.mxu0 0
    %94 = vmatprep.subr.bf16.mxu0 0
    %95 = vmatpush2.bf16.msra.mxu0 0
    %96 = vmatprep.subr.bf16.mxu0 0
    %97 = vmatpush2.bf16.msra.mxu0 0
    %98 = vmatprep.subr.bf16.mxu0 0
    %99 = vmatpush2.bf16.msra.mxu0 0
    %100 = vmatprep.subr.bf16.mxu0 0
    %101 = vmatpush2.bf16.msra.mxu0 0
    %102 = vmatprep.subr.bf16.mxu0 0
    %103 = vmatpush2.bf16.msra.mxu0 0
    %104 = vmatprep.mubr.bf16.mxu0 0
    %105 = vmatmul.mubr.bf16.gmra.mxu0 %v66
    %v106 = vpop.f32.mrf.mxu0
    %v107 = vadd.f32 %v57, %v106
    %v108 = vpop.f32.mrf.mxu0
    %v109 = vpop.f32.mrf.mxu0
    %v110 = vpop.f32.mrf.mxu0
    %111 = vdwg.mxu0
    %v112 = vtanh.pop %v107
    %v113 = vld [vmem:[%s3] sm:$0x1]
    %v114 = vpack.c.bf16 %v112, %v112
    %s115 = sld [smem:[#allocation2]]
    %v116 = vstv %s115
    %117 = vmatprep.subr.bf16.mxu0 0
    %118 = vmatpush1.bf16.xpose.msra.mxu0 0
    %119 = vmatprep.subr.bf16.mxu0 0
    %120 = vmatpush1.bf16.xpose.msra.mxu0 0
    %121 = vmatprep.subr.bf16.mxu0 0
    %122 = vmatpush1.bf16.xpose.msra.mxu0 0
    %123 = vmatprep.subr.bf16.mxu0 0
    %124 = vmatpush1.bf16.xpose.msra.mxu0 0
    %125 = vmatprep.subr.bf16.mxu0 0
    %126 = vmatpush1.bf16.xpose.msra.mxu0 0
    %127 = vmatprep.subr.bf16.mxu0 0
    %128 = vmatpush1.bf16.xpose.msra.mxu0 0
    %129 = vmatprep.subr.bf16.mxu0 0
    %130 = vmatpush1.bf16.xpose.msra.mxu0 0
    %131 = vmatprep.subr.bf16.mxu0 0
    %132 = vmatpush1.bf16.xpose.msra.mxu0 %v114
    %133 = vmatprep.subr.bf16.mxu0 0
    %134 = vmatpush2.bf16.xpose.msra.mxu0 0
    %135 = vmatprep.subr.bf16.mxu0 0
    %136 = vmatpush2.bf16.xpose.msra.mxu0 0
    %137 = vmatprep.subr.bf16.mxu0 0
    %138 = vmatpush2.bf16.xpose.msra.mxu0 0
    %139 = vmatprep.subr.bf16.mxu0 0
    %140 = vmatpush2.bf16.xpose.msra.mxu0 0
    %141 = vmatprep.subr.bf16.mxu0 0
    %142 = vmatpush2.bf16.xpose.msra.mxu0 0
    %143 = vmatprep.subr.bf16.mxu0 0
    %144 = vmatpush2.bf16.xpose.msra.mxu0 0
    %145 = vmatprep.subr.bf16.mxu0 0
    %146 = vmatpush2.bf16.xpose.msra.mxu0 0
    %147 = vmatprep.subr.bf16.mxu0 0
    %148 = vmatpush2.bf16.xpose.msra.mxu0 0
    %149 = vmatprep.mubr.bf16.mxu0 0
    %150 = vmatmul.mubr.bf16.gmra.mxu0 %v113
    %v151 = vpop.f32.mrf.mxu0
    %v152 = vadd.f32 %v116, %v151
    %v153 = vpop.f32.mrf.mxu0
    %v154 = vpop.f32.mrf.mxu0
    %v155 = vpop.f32.mrf.mxu0
    %156 = vdwg.mxu0
    %v157 = vxor.u32 %v152, 2147483648
    %v158 = vmul.f32 %v157, 1.442695
    %v159 = vpow.pop %v158
    %v160 = vadd.f32 %v159, 1.0
    %v161 = vrcp.pop %v160
    %v162 = vmul.f32 1.0, %v161
    %vm163 = vcmask 57344
    %164 = vst.msk [vmem:[#allocation8] sm:$0x1] %vm163, %v162
    // Predicated region
    $region30: #{tpu_custom_call.1} parent=1 // pred_check
      _
    $region31: #{tpu_custom_call.1} parent=1 // pred_check_branch
      %166 = sbr.rel (0) target = $region33
    $region32: #{tpu_custom_call.1} parent=1 // pred_region
      %s168 = ssub.s32 16, 16
      %169 = vsyncadd [#allocation5], %s168
      %s171 = sshll.u32 [#allocation8], 4
      %s172 = int_to_ptr.vmem [resolvable:$true] %s171
      %174 = dma.vmem_to_hbm [thread:$0]  %s172, 16, %s5, [#allocation5]
    $region33: #{tpu_custom_call.1} parent=1 // pred_fallthru
      _
    // Predicated region
    $region34: #{tpu_custom_call.1} parent=1 // pred_check
      _
    $region35: #{tpu_custom_call.1} parent=1 // pred_check_branch
      %176 = sbr.rel (0) target = $region37
    $region36: #{tpu_custom_call.1} parent=1 // pred_region
      %177 = dma.done [#allocation5], 16
    $region37: #{tpu_custom_call.1} parent=1 // pred_fallthru
      _
    %178 = vsyncpa [#allocation4], 1
    %179 = vsyncpa [#allocation7], 1
    %180 = vsyncpa [#allocation5], 1

</llo_original>
